<compile_context>
chip_gen: v6e
topology: v6e:2x2x1
jax: 0.10.0
libtpu: 0.0.40
codegen_flags: <defaults>
</compile_context>

<pallas_src>
import functools

import jax
import jax.numpy as jnp
from jax.experimental import pallas as pl
from jax.experimental.pallas import tpu as pltpu


HIDDEN = 128
LANE = 128


def _round_up(n, m):
    return ((n + m - 1) // m) * m


def d3qn_kernel(x_ref, w1_ref, b1_ref, w2_ref, b2_ref, w3_ref, b3_ref, out_ref):
    """Fused FCD3QN forward for one batch tile.

    h  = relu(x  @ W1 + b1)                    (TB, 128)   bf16 matmul, f32 acc
    h2 = relu(h  @ W2 + b2), W2 = [wa1 | wv1]  (TB, 256)   bf16 matmul, f32 acc
    q  =      h2 @ W3 + b3                     (TB, A_pad) f32 matmul (tiny)
    W3/b3 carry the dueling combine (value broadcast + advantage centering).
    """
    x = x_ref[...].astype(jnp.bfloat16)          # in-kernel cast (free under MXU)

    h = jnp.dot(x, w1_ref[...], preferred_element_type=jnp.float32) + b1_ref[...]
    h = jnp.maximum(h, 0.0)

    h2 = jnp.dot(h.astype(jnp.bfloat16), w2_ref[...],
                 preferred_element_type=jnp.float32) + b2_ref[...]
    h2 = jnp.maximum(h2, 0.0)

    q = jnp.dot(h2, w3_ref[...], preferred_element_type=jnp.float32) + b3_ref[...]
    out_ref[...] = q.astype(out_ref.dtype)


def fcd3qn_forward(x, packed, *, tile_b=2048, out_dtype=jnp.float32):
    """x: (B, obs) float32.  Returns Q-values (B, action_space) in out_dtype."""
    w1, b1 = packed["w1"], packed["b1"]
    w2, b2 = packed["w2"], packed["b2"]
    w3, b3 = packed["w3"], packed["b3"]
    A = packed["action_space"]
    A_pad = w3.shape[1]

    B, obs = x.shape
    # Batch tile: multiple of 8, capped by tile_b.  No padding of x is done;
    # Pallas pads the last partial tile on read and discards OOB rows on write.
    TB = _round_up(min(tile_b, _round_up(B, 8)), 8)
    grid = (pl.cdiv(B, TB),)

    batch_map = lambda i: (i, 0)
    const_map = lambda i: (0, 0)
    # Constant blocks: single-buffered (they never change across batch tiles).
    wspec = lambda shape: pl.BlockSpec(shape, const_map,
                                       pipeline_mode=pl.Buffered(1))

    out = pl.pallas_call(
        d3qn_kernel,
        out_shape=jax.ShapeDtypeStruct((B, A_pad), out_dtype),
        grid_spec=pltpu.PrefetchScalarGridSpec(
            num_scalar_prefetch=0,
            grid=grid,
            in_specs=[
                pl.BlockSpec((TB, obs), batch_map),       # x (batch-tiled, f32)
                wspec((obs, HIDDEN)),                     # W1 (bf16)
                wspec((1, HIDDEN)),                       # b1 (f32)
                wspec((HIDDEN, 2 * HIDDEN)),              # W2 = [wa1|wv1] (bf16)
                wspec((1, 2 * HIDDEN)),                   # b2 (f32)
                wspec((2 * HIDDEN, A_pad)),               # W3 (dueling folded, f32)
                wspec((1, A_pad)),                        # b3 (f32)
            ],
            out_specs=pl.BlockSpec((TB, A_pad), batch_map),
        ),
        compiler_params=pltpu.CompilerParams(
            dimension_semantics=("parallel",)),           # megacore shard on v7x
    )(x, w1, b1, w2, b2, w3, b3)

    return out[:, :A]


def make_forward_fn(packed, *, tile_b=2048, out_dtype=jnp.float32):
    """Jitted forward fn with weights / static shapes closed over, so the
    trailing [:, :A] slice fuses with downstream consumers."""
    @jax.jit
    def forward(x):
        return fcd3qn_forward(x, packed, tile_b=tile_b, out_dtype=out_dtype)
    return forward


def _torch_linear_init(key, fan_in, fan_out):
    """torch.nn.Linear default init: U(-1/sqrt(fan_in), 1/sqrt(fan_in)).
    Weight returned pre-transposed to (in, out); bias as a (1, out) row."""
    kw, kb = jax.random.split(key)
    bound = 1.0 / jnp.sqrt(jnp.array(fan_in, jnp.float32))
    w = jax.random.uniform(kw, (fan_in, fan_out), jnp.float32, -bound, bound)
    b = jax.random.uniform(kb, (1, fan_out), jnp.float32, -bound, bound)
    return w, b


def make_params(key, obs_space, action_space, hidden=HIDDEN):
    keys = jax.random.split(key, 5)
    w1, b1 = _torch_linear_init(keys[0], obs_space, hidden)        # feature
    wa1, ba1 = _torch_linear_init(keys[1], hidden, hidden)         # advantage hidden
    wa2, ba2 = _torch_linear_init(keys[2], hidden, action_space)   # advantage out
    wv1, bv1 = _torch_linear_init(keys[3], hidden, hidden)         # value hidden
    wv2, bv2 = _torch_linear_init(keys[4], hidden, 1)              # value out
    return (w1, b1, wa1, ba1, wa2, ba2, wv1, bv1, wv2, bv2)


def pack_params(raw_params, action_space):
    """Fuse branches, fold the dueling mean into the output weights, lane-pad
    the action axis, and cast the two big matmul weights to bf16.  The small
    output layer (W3/b3) stays f32 for closer parity with the f32 reference."""
    (w1, b1, wa1, ba1, wa2, ba2, wv1, bv1, wv2, bv2) = raw_params
    A = action_space
    A_pad = _round_up(A, LANE)

    # One fused (128, 256) hidden matmul instead of two (128, 128) matmuls.
    w2 = jnp.concatenate([wa1, wv1], axis=1)                       # (128, 256)
    b2 = jnp.concatenate([ba1, bv1], axis=1)                       # (1, 256)

    # Exact folding of  Q = V + A - mean(A)  into a single output matmul:
    wa2_c = wa2 - jnp.mean(wa2, axis=1, keepdims=True)             # center adv weights
    ba2_c = ba2 - jnp.mean(ba2, axis=1, keepdims=True)
    w3 = jnp.concatenate([wa2_c, jnp.tile(wv2, (1, A))], axis=0)   # (256, A)
    b3 = ba2_c + bv2                                               # (1, A)

    # Lane-pad the action axis so the output store is a full, unmasked vreg.
    w3 = jnp.pad(w3, ((0, 0), (0, A_pad - A)))
    b3 = jnp.pad(b3, ((0, 0), (0, A_pad - A)))

    bf16 = lambda a: a.astype(jnp.bfloat16)
    f32 = lambda a: a.astype(jnp.float32)
    return dict(
        w1=bf16(w1), b1=f32(b1),
        w2=bf16(w2), b2=f32(b2),
        w3=f32(w3), b3=f32(b3),
        action_space=A,
    )


def reference_forward(x, raw_params):
    """Pure-JAX f32 reference matching the PyTorch module semantics."""
    (w1, b1, wa1, ba1, wa2, ba2, wv1, bv1, wv2, bv2) = raw_params
    h = jnp.maximum(x @ w1 + b1, 0.0)
    adv = jnp.maximum(h @ wa1 + ba1, 0.0) @ wa2 + ba2
    val = jnp.maximum(h @ wv1 + bv1, 0.0) @ wv2 + bv2
    return val + adv - adv.mean(axis=-1, keepdims=True)


if __name__ == "__main__":
    obs_space = 16
    action_space = 6
    batch = 4

    key = jax.random.PRNGKey(0)
    k_params, k_x = jax.random.split(key)
    raw_params = make_params(k_params, obs_space, action_space)
    packed = pack_params(raw_params, action_space)
    x = jax.random.normal(k_x, (batch, obs_space), jnp.float32)

    forward = make_forward_fn(packed)
    out = jax.block_until_ready(forward(x))

    ref = reference_forward(x, raw_params)
    assert out.shape == (batch, action_space)
    # W1/W2 (and in-kernel x) are bf16 with f32 accumulation, so compare
    # against the float32 reference with a correspondingly relaxed tolerance.
    assert jnp.allclose(out, ref, atol=3e-2, rtol=3e-2), (
        f"mismatch vs reference, max abs diff={jnp.max(jnp.abs(out - ref))}")

    print("KERNEL_OK")
</pallas_src>

<mosaic_0001>
module attributes {stable_mosaic.version = 11 : i64} {
  func.func @d3qn_kernel(%arg0: i32, %arg1: memref<8x16xf32, #tpu.memory_space<vmem>>, %arg2: memref<16x128xbf16, #tpu.memory_space<vmem>>, %arg3: memref<1x128xf32, #tpu.memory_space<vmem>>, %arg4: memref<128x256xbf16, #tpu.memory_space<vmem>>, %arg5: memref<1x256xf32, #tpu.memory_space<vmem>>, %arg6: memref<256x128xf32, #tpu.memory_space<vmem>>, %arg7: memref<1x128xf32, #tpu.memory_space<vmem>>, %arg8: memref<8x128xf32, #tpu.memory_space<vmem>>) attributes {dimension_semantics = [#tpu.dimension_semantics<parallel>], iteration_bounds = array<i64: 1>, scalar_prefetch = 0 : i64, scratch_operands = 0 : i64, tpu.core_type = #tpu.core_type<tc>, window_params = [{transform_indices = @transform_0, window_bounds = array<i64: 8, 16>}, {pipeline_mode = #tpu.pipeline_mode<synchronous>, transform_indices = @transform_1, window_bounds = array<i64: 16, 128>}, {pipeline_mode = #tpu.pipeline_mode<synchronous>, transform_indices = @transform_2, window_bounds = array<i64: 1, 128>}, {pipeline_mode = #tpu.pipeline_mode<synchronous>, transform_indices = @transform_3, window_bounds = array<i64: 128, 256>}, {pipeline_mode = #tpu.pipeline_mode<synchronous>, transform_indices = @transform_4, window_bounds = array<i64: 1, 256>}, {pipeline_mode = #tpu.pipeline_mode<synchronous>, transform_indices = @transform_5, window_bounds = array<i64: 256, 128>}, {pipeline_mode = #tpu.pipeline_mode<synchronous>, transform_indices = @transform_6, window_bounds = array<i64: 1, 128>}, {transform_indices = @transform_7, window_bounds = array<i64: 8, 128>}]} {
    %c0 = arith.constant 0 : index
    %c0_0 = arith.constant 0 : index
    %0 = vector.load %arg1[%c0, %c0_0] : memref<8x16xf32, #tpu.memory_space<vmem>>, vector<8x16xf32>
    %1 = arith.truncf %0 : vector<8x16xf32> to vector<8x16xbf16>
    %c0_1 = arith.constant 0 : index
    %c0_2 = arith.constant 0 : index
    %2 = vector.load %arg2[%c0_1, %c0_2] : memref<16x128xbf16, #tpu.memory_space<vmem>>, vector<16x128xbf16>
    %cst = arith.constant dense<0.000000e+00> : vector<8x128xf32>
    %3 = tpu.matmul %1, %2, %cst {dimension_numbers = #tpu.dot_dimension_numbers<[1], [0], [0], [1], [0, 0, 1, 1], [], []>} : vector<8x16xbf16>, vector<16x128xbf16>, vector<8x128xf32> -> vector<8x128xf32>
    %c0_3 = arith.constant 0 : index
    %c0_4 = arith.constant 0 : index
    %4 = vector.load %arg3[%c0_3, %c0_4] : memref<1x128xf32, #tpu.memory_space<vmem>>, vector<1x128xf32>
    %5 = vector.broadcast %4 : vector<1x128xf32> to vector<8x128xf32>
    %6 = arith.addf %3, %5 : vector<8x128xf32>
    %cst_5 = arith.constant 0.000000e+00 : f32
    %7 = vector.broadcast %cst_5 : f32 to vector<8x128xf32>
    %8 = arith.maximumf %6, %7 : vector<8x128xf32>
    %9 = arith.truncf %8 : vector<8x128xf32> to vector<8x128xbf16>
    %c0_6 = arith.constant 0 : index
    %c0_7 = arith.constant 0 : index
    %10 = vector.load %arg4[%c0_6, %c0_7] : memref<128x256xbf16, #tpu.memory_space<vmem>>, vector<128x256xbf16>
    %cst_8 = arith.constant dense<0.000000e+00> : vector<8x256xf32>
    %11 = tpu.matmul %9, %10, %cst_8 {dimension_numbers = #tpu.dot_dimension_numbers<[1], [0], [0], [1], [0, 0, 1, 1], [], []>} : vector<8x128xbf16>, vector<128x256xbf16>, vector<8x256xf32> -> vector<8x256xf32>
    %c0_9 = arith.constant 0 : index
    %c0_10 = arith.constant 0 : index
    %12 = vector.load %arg5[%c0_9, %c0_10] : memref<1x256xf32, #tpu.memory_space<vmem>>, vector<1x256xf32>
    %13 = vector.broadcast %12 : vector<1x256xf32> to vector<8x256xf32>
    %14 = arith.addf %11, %13 : vector<8x256xf32>
    %cst_11 = arith.constant 0.000000e+00 : f32
    %15 = vector.broadcast %cst_11 : f32 to vector<8x256xf32>
    %16 = arith.maximumf %14, %15 : vector<8x256xf32>
    %c0_12 = arith.constant 0 : index
    %c0_13 = arith.constant 0 : index
    %17 = vector.load %arg6[%c0_12, %c0_13] : memref<256x128xf32, #tpu.memory_space<vmem>>, vector<256x128xf32>
    %cst_14 = arith.constant dense<0.000000e+00> : vector<8x128xf32>
    %18 = tpu.matmul %16, %17, %cst_14 {dimension_numbers = #tpu.dot_dimension_numbers<[1], [0], [0], [1], [0, 0, 1, 1], [], []>} : vector<8x256xf32>, vector<256x128xf32>, vector<8x128xf32> -> vector<8x128xf32>
    %c0_15 = arith.constant 0 : index
    %c0_16 = arith.constant 0 : index
    %19 = vector.load %arg7[%c0_15, %c0_16] : memref<1x128xf32, #tpu.memory_space<vmem>>, vector<1x128xf32>
    %20 = vector.broadcast %19 : vector<1x128xf32> to vector<8x128xf32>
    %21 = arith.addf %18, %20 : vector<8x128xf32>
    %c0_17 = arith.constant 0 : index
    %c0_18 = arith.constant 0 : index
    %22 = vector.load %arg8[%c0_17, %c0_18] : memref<8x128xf32, #tpu.memory_space<vmem>>, vector<8x128xf32>
    tpu.vector_store %arg8[%c0_17, %c0_18], %21 {strides = array<i32>} : memref<8x128xf32, #tpu.memory_space<vmem>>, vector<8x128xf32>,
    return
  }
  func.func @transform_0(%arg0: i32) -> (i32, i32) {
    %c0_i32 = arith.constant 0 : i32
    %c0_i32_0 = arith.constant 0 : i32
    return %arg0, %c0_i32 : i32, i32
  }
  func.func @transform_1(%arg0: i32) -> (i32, i32) {
    %c0_i32 = arith.constant 0 : i32
    %c0_i32_0 = arith.constant 0 : i32
    %c0_i32_1 = arith.constant 0 : i32
    return %c0_i32, %c0_i32_0 : i32, i32
  }
  func.func @transform_2(%arg0: i32) -> (i32, i32) {
    %c0_i32 = arith.constant 0 : i32
    %c0_i32_0 = arith.constant 0 : i32
    %c0_i32_1 = arith.constant 0 : i32
    return %c0_i32, %c0_i32_0 : i32, i32
  }
  func.func @transform_3(%arg0: i32) -> (i32, i32) {
    %c0_i32 = arith.constant 0 : i32
    %c0_i32_0 = arith.constant 0 : i32
    %c0_i32_1 = arith.constant 0 : i32
    return %c0_i32, %c0_i32_0 : i32, i32
  }
  func.func @transform_4(%arg0: i32) -> (i32, i32) {
    %c0_i32 = arith.constant 0 : i32
    %c0_i32_0 = arith.constant 0 : i32
    %c0_i32_1 = arith.constant 0 : i32
    return %c0_i32, %c0_i32_0 : i32, i32
  }
  func.func @transform_5(%arg0: i32) -> (i32, i32) {
    %c0_i32 = arith.constant 0 : i32
    %c0_i32_0 = arith.constant 0 : i32
    %c0_i32_1 = arith.constant 0 : i32
    return %c0_i32, %c0_i32_0 : i32, i32
  }
  func.func @transform_6(%arg0: i32) -> (i32, i32) {
    %c0_i32 = arith.constant 0 : i32
    %c0_i32_0 = arith.constant 0 : i32
    %c0_i32_1 = arith.constant 0 : i32
    return %c0_i32, %c0_i32_0 : i32, i32
  }
  func.func @transform_7(%arg0: i32) -> (i32, i32) {
    %c0_i32 = arith.constant 0 : i32
    %c0_i32_0 = arith.constant 0 : i32
    return %arg0, %c0_i32 : i32, i32
  }
}

</mosaic_0001>

<llo_original>
// kernel: forward.1
$region0: #{forward.1}
  #allocation0 [shape = 'u32[]', space=smem, size = 0x4, offset = 0x4, fixed_abs, tag = 'smem constant byte address 0x4 - core index']
  #allocation1 [shape = 'u32[144,128]{1,0:T(1,128)}', space=vmem, size = 0x12000, scoped, tag = 'internal scratch']
  %s0 = inlined_call_operand.hbm [shape: f32[4,16], index: 0, kind: input, shape index: {}]
  %s1 = inlined_call_operand.hbm [shape: bf16[16,128], index: 1, kind: input, shape index: {}]
  %s2 = inlined_call_operand.hbm [shape: f32[1,128], index: 2, kind: input, shape index: {}]
  %s3 = inlined_call_operand.hbm [shape: bf16[128,256], index: 3, kind: input, shape index: {}]
  %s4 = inlined_call_operand.vmem [shape: f32[1,256], index: 4, kind: input, shape index: {}]
  %s5 = inlined_call_operand.hbm [shape: f32[256,128], index: 5, kind: input, shape index: {}]
  %s6 = inlined_call_operand.vmem [shape: f32[1,128], index: 6, kind: input, shape index: {}]
  %s7 = inlined_call_operand.hbm [shape: f32[4,128], index: 7, kind: output, shape index: {}]
  %s8 = sld [smem:[#allocation0]]
  $region58: #{forward.1} parent=0
    _
  %s10 = ssub.s32 1, %s8
  %s11 = scalar_select 0, %s10, %s8
  $region1: #{forward.1} parent=0
    #allocation2 [shape = 'u8[4096]{0}', space=vmem, size = 0x1000, scoped, tag = 'input window, operand 0, single buffered']
    #allocation3 [shape = 's32[1]{0}', space=sflag, size = 0x4, scoped, tag = 'scoped memory for forward.1']
    #allocation4 [shape = 's32[1]{0}', space=sflag, size = 0x4, scoped, tag = 'scoped memory for forward.1']
    #allocation5 [shape = 'u8[4096]{0}', space=vmem, size = 0x1000, scoped, tag = 'input window, operand 1, single buffered']
    #allocation6 [shape = 's32[1]{0}', space=sflag, size = 0x4, scoped, tag = 'scoped memory for forward.1']
    #allocation7 [shape = 'u8[512]{0}', space=vmem, size = 0x400, scoped, tag = 'input window, operand 2, single buffered']
    #allocation8 [shape = 'u8[65536]{0}', space=vmem, size = 0x10000, scoped, tag = 'input window, operand 3, single buffered']
    #allocation9 [shape = 's32[1]{0}', space=sflag, size = 0x4, scoped, tag = 'scoped memory for forward.1']
    #allocation10 [shape = 'u8[131072]{0}', space=vmem, size = 0x20000, scoped, tag = 'input window, operand 5, single buffered']
    #allocation11 [shape = 'u8[4096]{0}', space=vmem, size = 0x1000, scoped, tag = 'output window, operand 0, single buffered']
    %12 = vsyncpa [#allocation3], 0
    %13 = vsyncpa [#allocation6], 0
    %14 = vsyncpa [#allocation9], 0
    %15 = vsyncpa [#allocation4], 0
    // Predicated region
    $region2: #{forward.1} parent=1 // pred_check
      _
    $region3: #{forward.1} parent=1 // pred_check_branch
      %17 = sbr.rel (0) target = $region5
    $region4: #{forward.1} parent=1 // pred_region
      %s19 = ssub.s32 128, 64
      %20 = vsyncadd [#allocation3], %s19
      %s21 = sshll.u32 [#allocation2], 4
      %s22 = int_to_ptr.vmem [resolvable:$true] %s21
      %27 = dma.hbm_to_vmem [thread:$0]  %s0, 64, %s22, [#allocation3], 64, 64, 4
    $region5: #{forward.1} parent=1 // pred_fallthru
      _
    // Predicated region
    $region6: #{forward.1} parent=1 // pred_check
      _
    $region7: #{forward.1} parent=1 // pred_check_branch
      %29 = sbr.rel (0) target = $region9
    $region8: #{forward.1} parent=1 // pred_region
      %s31 = ssub.s32 128, 128
      %32 = vsyncadd [#allocation6], %s31
      %s33 = sshll.u32 [#allocation5], 4
      %s34 = int_to_ptr.vmem [resolvable:$true] %s33
      %39 = dma.hbm_to_vmem [thread:$0]  %s1, 128, %s34, [#allocation6], 64, 64, 4
    $region9: #{forward.1} parent=1 // pred_fallthru
      _
    // Predicated region
    $region10: #{forward.1} parent=1 // pred_check
      _
    $region11: #{forward.1} parent=1 // pred_check_branch
      %41 = sbr.rel (0) target = $region13
    $region12: #{forward.1} parent=1 // pred_region
      %s43 = ssub.s32 16, 16
      %44 = vsyncadd [#allocation6], %s43
      %s46 = sshll.u32 [#allocation7], 4
      %s47 = int_to_ptr.vmem [resolvable:$true] %s46
      %49 = dma.hbm_to_vmem [thread:$0]  %s2, 16, %s47, [#allocation6]
    $region13: #{forward.1} parent=1 // pred_fallthru
      _
    // Predicated region
    $region14: #{forward.1} parent=1 // pred_check
      _
    $region15: #{forward.1} parent=1 // pred_check_branch
      %51 = sbr.rel (0) target = $region17
    $region16: #{forward.1} parent=1 // pred_region
      %s53 = ssub.s32 2048, 2048
      %54 = vsyncadd [#allocation9], %s53
      %s55 = sshll.u32 [#allocation8], 4
      %s56 = int_to_ptr.vmem [resolvable:$true] %s55
      %61 = dma.hbm_to_vmem [thread:$0]  %s3, 2048, %s56, [#allocation9], 128, 128, 8
    $region17: #{forward.1} parent=1 // pred_fallthru
      _
    // Predicated region
    $region18: #{forward.1} parent=1 // pred_check
      _
    $region19: #{forward.1} parent=1 // pred_check_branch
      %63 = sbr.rel (0) target = $region21
    $region20: #{forward.1} parent=1 // pred_region
      _
    $region21: #{forward.1} parent=1 // pred_fallthru
      _
    // Predicated region
    $region22: #{forward.1} parent=1 // pred_check
      _
    $region23: #{forward.1} parent=1 // pred_check_branch
      %65 = sbr.rel (0) target = $region25
    $region24: #{forward.1} parent=1 // pred_region
      %s67 = ssub.s32 4096, 4096
      %68 = vsyncadd [#allocation9], %s67
      %s69 = sshll.u32 [#allocation10], 4
      %s70 = int_to_ptr.vmem [resolvable:$true] %s69
      %75 = dma.hbm_to_vmem [thread:$0]  %s5, 4096, %s70, [#allocation9], 128, 128, 8
    $region25: #{forward.1} parent=1 // pred_fallthru
      _
    // Predicated region
    $region26: #{forward.1} parent=1 // pred_check
      _
    $region27: #{forward.1} parent=1 // pred_check_branch
      %77 = sbr.rel (0) target = $region29
    $region28: #{forward.1} parent=1 // pred_region
      _
    $region29: #{forward.1} parent=1 // pred_fallthru
      _
    // Predicated region
    $region30: #{forward.1} parent=1 // pred_check
      _
    $region31: #{forward.1} parent=1 // pred_check_branch
      %79 = sbr.rel (0) target = $region33
    $region32: #{forward.1} parent=1 // pred_region
      %80 = dma.done [#allocation3], 128
    $region33: #{forward.1} parent=1 // pred_fallthru
      _
    // Predicated region
    $region34: #{forward.1} parent=1 // pred_check
      _
    $region35: #{forward.1} parent=1 // pred_check_branch
      %82 = sbr.rel (0) target = $region37
    $region36: #{forward.1} parent=1 // pred_region
      %83 = dma.done [#allocation6], 128
    $region37: #{forward.1} parent=1 // pred_fallthru
      _
    // Predicated region
    $region38: #{forward.1} parent=1 // pred_check
      _
    $region39: #{forward.1} parent=1 // pred_check_branch
      %85 = sbr.rel (0) target = $region41
    $region40: #{forward.1} parent=1 // pred_region
      %86 = dma.done [#allocation6], 16
    $region41: #{forward.1} parent=1 // pred_fallthru
      _
    // Predicated region
    $region42: #{forward.1} parent=1 // pred_check
      _
    $region43: #{forward.1} parent=1 // pred_check_branch
      %88 = sbr.rel (0) target = $region45
    $region44: #{forward.1} parent=1 // pred_region
      %89 = dma.done [#allocation9], 2048
    $region45: #{forward.1} parent=1 // pred_fallthru
      _
    // Predicated region
    $region46: #{forward.1} parent=1 // pred_check
      _
    $region47: #{forward.1} parent=1 // pred_check_branch
      %91 = sbr.rel (0) target = $region49
    $region48: #{forward.1} parent=1 // pred_region
      %92 = dma.done [#allocation9], 4096
    $region49: #{forward.1} parent=1 // pred_fallthru
      _
    %v94 = vld [vmem:[#allocation2] sm:$0xff]
    %v95 = vpack.c.bf16 %v94, %v94
    %v96 = vld [vmem:[#allocation5] sm:$0xf]
    %v97 = vld [vmem:[#allocation5 + $0x4] sm:$0xf]
    %v98 = vld [vmem:[#allocation7] sm:$0x1]
    %v100 = vlaneseq
    %v101 = vshrl.u32 %v100, 7
    %v102 = vsub.s32 0, %v101
    %v103 = vrot.slane %v98, %v102
    %v107 = vunpack.c.l.b16 %v96
    %v108 = vunpack.c.l.b16 %v97
    %v109 = vpack.c.b16 %v108, %v107
    %vm111 = vcmask 130048
    %v113 = vsel %vm111, %v95, 0
    %115 = vmatprep.subr.bf16.mxu0 0
    %116 = vmatpush1.bf16.msra.mxu0 0
    %117 = vmatprep.subr.bf16.mxu0 0
    %118 = vmatpush1.bf16.msra.mxu0 0
    %119 = vmatprep.subr.bf16.mxu0 0
    %120 = vmatpush1.bf16.msra.mxu0 0
    %121 = vmatprep.subr.bf16.mxu0 0
    %122 = vmatpush1.bf16.msra.mxu0 0
    %123 = vmatprep.subr.bf16.mxu0 0
    %124 = vmatpush1.bf16.msra.mxu0 0
    %125 = vmatprep.subr.bf16.mxu0 0
    %126 = vmatpush1.bf16.msra.mxu0 0
    %127 = vmatprep.subr.bf16.mxu0 0
    %128 = vmatpush1.bf16.msra.mxu0 0
    %129 = vmatprep.subr.bf16.mxu0 0
    %130 = vmatpush1.bf16.msra.mxu0 %v109
    %131 = vmatprep.subr.bf16.mxu0 0
    %132 = vmatpush2.bf16.msra.mxu0 0
    %133 = vmatprep.subr.bf16.mxu0 0
    %134 = vmatpush2.bf16.msra.mxu0 0
    %135 = vmatprep.subr.bf16.mxu0 0
    %136 = vmatpush2.bf16.msra.mxu0 0
    %137 = vmatprep.subr.bf16.mxu0 0
    %138 = vmatpush2.bf16.msra.mxu0 0
    %139 = vmatprep.subr.bf16.mxu0 0
    %140 = vmatpush2.bf16.msra.mxu0 0
    %141 = vmatprep.subr.bf16.mxu0 0
    %142 = vmatpush2.bf16.msra.mxu0 0
    %143 = vmatprep.subr.bf16.mxu0 0
    %144 = vmatpush2.bf16.msra.mxu0 0
    %145 = vmatprep.subr.bf16.mxu0 0
    %146 = vmatpush2.bf16.msra.mxu0 0
    %147 = vmatprep.mubr.bf16.mxu0 0
    %148 = vmatmul.mubr.bf16.gmra.mxu0 %v113
    %v149 = vpop.f32.mrf.mxu0
    %v150 = vadd.f32 %v103, %v149
    %v151 = vpop.f32.mrf.mxu0
    %v152 = vpop.f32.mrf.mxu0
    %v153 = vpop.f32.mrf.mxu0
    %154 = vdwg.mxu0
    %v155 = vmax.f32 %v150, 0.0
    %v156 = vpack.c.bf16 %v155, %v155
    %v157 = vld [vmem:[#allocation8] sm:$0xff]
    %v158 = vld [vmem:[#allocation8 + $0x8] sm:$0xff]
    %v159 = vld [vmem:[#allocation8 + $0x10] sm:$0xff]
    %v160 = vld [vmem:[#allocation8 + $0x18] sm:$0xff]
    %v161 = vld [vmem:[#allocation8 + $0x20] sm:$0xff]
    %v162 = vld [vmem:[#allocation8 + $0x28] sm:$0xff]
    %v163 = vld [vmem:[#allocation8 + $0x30] sm:$0xff]
    %v164 = vld [vmem:[#allocation8 + $0x38] sm:$0xff]
    %v165 = vld [vmem:[#allocation8 + $0x40] sm:$0xff]
    %v166 = vld [vmem:[#allocation8 + $0x48] sm:$0xff]
    %v167 = vld [vmem:[#allocation8 + $0x50] sm:$0xff]
    %v168 = vld [vmem:[#allocation8 + $0x58] sm:$0xff]
    %v169 = vld [vmem:[#allocation8 + $0x60] sm:$0xff]
    %v170 = vld [vmem:[#allocation8 + $0x68] sm:$0xff]
    %v171 = vld [vmem:[#allocation8 + $0x70] sm:$0xff]
    %v172 = vld [vmem:[#allocation8 + $0x78] sm:$0xff]
    %v173 = vld [vmem:[%s4] sm:$0x3]
    %v175 = vlaneseq
    %v176 = vshrl.u32 %v175, 7
    %v177 = vsub.s32 0, %v176
    %v178 = vrot.slane %v173, %v177
    %v179 = vlaneseq
    %v180 = vshrl.u32 %v179, 7
    %v181 = vsub.s32 1, %v180
    %v182 = vrot.slane %v173, %v181
    %v201 = vunpack.c.l.b16 %v157
    %v202 = vunpack.c.h.b16 %v157
    %v203 = vunpack.c.l.b16 %v158
    %v204 = vunpack.c.h.b16 %v158
    %v205 = vunpack.c.l.b16 %v159
    %v206 = vunpack.c.h.b16 %v159
    %v207 = vunpack.c.l.b16 %v160
    %v208 = vunpack.c.h.b16 %v160
    %v209 = vunpack.c.l.b16 %v161
    %v210 = vunpack.c.h.b16 %v161
    %v211 = vunpack.c.l.b16 %v162
    %v212 = vunpack.c.h.b16 %v162
    %v213 = vunpack.c.l.b16 %v163
    %v214 = vunpack.c.h.b16 %v163
    %v215 = vunpack.c.l.b16 %v164
    %v216 = vunpack.c.h.b16 %v164
    %v217 = vunpack.c.l.b16 %v165
    %v218 = vunpack.c.h.b16 %v165
    %v219 = vunpack.c.l.b16 %v166
    %v220 = vunpack.c.h.b16 %v166
    %v221 = vunpack.c.l.b16 %v167
    %v222 = vunpack.c.h.b16 %v167
    %v223 = vunpack.c.l.b16 %v168
    %v224 = vunpack.c.h.b16 %v168
    %v225 = vunpack.c.l.b16 %v169
    %v226 = vunpack.c.h.b16 %v169
    %v227 = vunpack.c.l.b16 %v170
    %v228 = vunpack.c.h.b16 %v170
    %v229 = vunpack.c.l.b16 %v171
    %v230 = vunpack.c.h.b16 %v171
    %v231 = vunpack.c.l.b16 %v172
    %v232 = vunpack.c.h.b16 %v172
    %v233 = vpack.c.b16 %v203, %v201
    %v234 = vpack.c.b16 %v204, %v202
    %v235 = vpack.c.b16 %v207, %v205
    %v236 = vpack.c.b16 %v208, %v206
    %v237 = vpack.c.b16 %v211, %v209
    %v238 = vpack.c.b16 %v212, %v210
    %v239 = vpack.c.b16 %v215, %v213
    %v240 = vpack.c.b16 %v216, %v214
    %v241 = vpack.c.b16 %v219, %v217
    %v242 = vpack.c.b16 %v220, %v218
    %v243 = vpack.c.b16 %v223, %v221
    %v244 = vpack.c.b16 %v224, %v222
    %v245 = vpack.c.b16 %v227, %v225
    %v246 = vpack.c.b16 %v228, %v226
    %v247 = vpack.c.b16 %v231, %v229
    %v248 = vpack.c.b16 %v232, %v230
    %265 = vmatprep.subr.bf16.mxu0 %v248
    %266 = vmatpush1.bf16.msra.mxu0 %v247
    %267 = vmatprep.subr.bf16.mxu0 %v246
    %268 = vmatpush1.bf16.msra.mxu0 %v245
    %269 = vmatprep.subr.bf16.mxu0 %v244
    %270 = vmatpush1.bf16.msra.mxu0 %v243
    %271 = vmatprep.subr.bf16.mxu0 %v242
    %272 = vmatpush1.bf16.msra.mxu0 %v241
    %273 = vmatprep.subr.bf16.mxu0 %v240
    %274 = vmatpush1.bf16.msra.mxu0 %v239
    %275 = vmatprep.subr.bf16.mxu0 %v238
    %276 = vmatpush1.bf16.msra.mxu0 %v237
    %277 = vmatprep.subr.bf16.mxu0 %v236
    %278 = vmatpush1.bf16.msra.mxu0 %v235
    %279 = vmatprep.subr.bf16.mxu0 %v234
    %280 = vmatpush1.bf16.msra.mxu0 %v233
    %281 = vmatprep.subr.bf16.mxu0 0
    %282 = vmatpush2.bf16.msra.mxu0 0
    %283 = vmatprep.subr.bf16.mxu0 0
    %284 = vmatpush2.bf16.msra.mxu0 0
    %285 = vmatprep.subr.bf16.mxu0 0
    %286 = vmatpush2.bf16.msra.mxu0 0
    %287 = vmatprep.subr.bf16.mxu0 0
    %288 = vmatpush2.bf16.msra.mxu0 0
    %289 = vmatprep.subr.bf16.mxu0 0
    %290 = vmatpush2.bf16.msra.mxu0 0
    %291 = vmatprep.subr.bf16.mxu0 0
    %292 = vmatpush2.bf16.msra.mxu0 0
    %293 = vmatprep.subr.bf16.mxu0 0
    %294 = vmatpush2.bf16.msra.mxu0 0
    %295 = vmatprep.subr.bf16.mxu0 0
    %296 = vmatpush2.bf16.msra.mxu0 0
    %297 = vmatprep.mubr.bf16.mxu0 0
    %298 = vmatmul.mubr.bf16.gmra.mxu0 %v156
    %v299 = vpop.f32.mrf.mxu0
    %v300 = vadd.f32 %v178, %v299
    %v301 = vpop.f32.mrf.mxu0
    %v302 = vadd.f32 %v182, %v301
    %v303 = vpop.f32.mrf.mxu0
    %v304 = vpop.f32.mrf.mxu0
    %305 = vdwg.mxu0
    %v306 = vmax.f32 %v300, 0.0
    %v307 = vmax.f32 %v302, 0.0
    %v308 = vld [vmem:[#allocation10] sm:$0xff]
    %v309 = vld [vmem:[#allocation10 + $0x8] sm:$0xff]
    %v310 = vld [vmem:[#allocation10 + $0x10] sm:$0xff]
    %v311 = vld [vmem:[#allocation10 + $0x18] sm:$0xff]
    %v312 = vld [vmem:[#allocation10 + $0x20] sm:$0xff]
    %v313 = vld [vmem:[#allocation10 + $0x28] sm:$0xff]
    %v314 = vld [vmem:[#allocation10 + $0x30] sm:$0xff]
    %v315 = vld [vmem:[#allocation10 + $0x38] sm:$0xff]
    %v316 = vld [vmem:[#allocation10 + $0x40] sm:$0xff]
    %v317 = vld [vmem:[#allocation10 + $0x48] sm:$0xff]
    %v318 = vld [vmem:[#allocation10 + $0x50] sm:$0xff]
    %v319 = vld [vmem:[#allocation10 + $0x58] sm:$0xff]
    %v320 = vld [vmem:[#allocation10 + $0x60] sm:$0xff]
    %v321 = vld [vmem:[#allocation10 + $0x68] sm:$0xff]
    %v322 = vld [vmem:[#allocation10 + $0x70] sm:$0xff]
    %v323 = vld [vmem:[#allocation10 + $0x78] sm:$0xff]
    %v324 = vld [vmem:[#allocation10 + $0x80] sm:$0xff]
    %v325 = vld [vmem:[#allocation10 + $0x88] sm:$0xff]
    %v326 = vld [vmem:[#allocation10 + $0x90] sm:$0xff]
    %v327 = vld [vmem:[#allocation10 + $0x98] sm:$0xff]
    %v328 = vld [vmem:[#allocation10 + $0xa0] sm:$0xff]
    %v329 = vld [vmem:[#allocation10 + $0xa8] sm:$0xff]
    %v330 = vld [vmem:[#allocation10 + $0xb0] sm:$0xff]
    %v331 = vld [vmem:[#allocation10 + $0xb8] sm:$0xff]
    %v332 = vld [vmem:[#allocation10 + $0xc0] sm:$0xff]
    %v333 = vld [vmem:[#allocation10 + $0xc8] sm:$0xff]
    %v334 = vld [vmem:[#allocation10 + $0xd0] sm:$0xff]
    %v335 = vld [vmem:[#allocation10 + $0xd8] sm:$0xff]
    %v336 = vld [vmem:[#allocation10 + $0xe0] sm:$0xff]
    %v337 = vld [vmem:[#allocation10 + $0xe8] sm:$0xff]
    %v338 = vld [vmem:[#allocation10 + $0xf0] sm:$0xff]
    %v339 = vld [vmem:[#allocation10 + $0xf8] sm:$0xff]
    %v340 = vld [vmem:[%s6] sm:$0x1]
    %v342 = vlaneseq
    %v343 = vshrl.u32 %v342, 7
    %v344 = vsub.s32 0, %v343
    %v345 = vrot.slane %v340, %v344
    %347 = vmatprep.subr.mxu0 0.0
    %348 = vmatpush1.msra.mxu0 %v323
    %349 = vmatprep.subr.mxu0 0.0
    %350 = vmatpush1.msra.mxu0 %v322
    %351 = vmatprep.subr.mxu0 0.0
    %352 = vmatpush1.msra.mxu0 %v321
    %353 = vmatprep.subr.mxu0 0.0
    %354 = vmatpush1.msra.mxu0 %v320
    %355 = vmatprep.subr.mxu0 0.0
    %356 = vmatpush1.msra.mxu0 %v319
    %357 = vmatprep.subr.mxu0 0.0
    %358 = vmatpush1.msra.mxu0 %v318
    %359 = vmatprep.subr.mxu0 0.0
    %360 = vmatpush1.msra.mxu0 %v317
    %361 = vmatprep.subr.mxu0 0.0
    %362 = vmatpush1.msra.mxu0 %v316
    %363 = vmatprep.subr.mxu0 0.0
    %364 = vmatpush1.msra.mxu0 %v315
    %365 = vmatprep.subr.mxu0 0.0
    %366 = vmatpush1.msra.mxu0 %v314
    %367 = vmatprep.subr.mxu0 0.0
    %368 = vmatpush1.msra.mxu0 %v313
    %369 = vmatprep.subr.mxu0 0.0
    %370 = vmatpush1.msra.mxu0 %v312
    %371 = vmatprep.subr.mxu0 0.0
    %372 = vmatpush1.msra.mxu0 %v311
    %373 = vmatprep.subr.mxu0 0.0
    %374 = vmatpush1.msra.mxu0 %v310
    %375 = vmatprep.subr.mxu0 0.0
    %376 = vmatpush1.msra.mxu0 %v309
    %377 = vmatprep.subr.mxu0 0.0
    %378 = vmatpush1.msra.mxu0 %v308
    %379 = vmatprep.subr.mxu0 0.0
    %380 = vmatpush2.msra.mxu0 %v339
    %381 = vmatprep.subr.mxu0 0.0
    %382 = vmatpush2.msra.mxu0 %v338
    %383 = vmatprep.subr.mxu0 0.0
    %384 = vmatpush2.msra.mxu0 %v337
    %385 = vmatprep.subr.mxu0 0.0
    %386 = vmatpush2.msra.mxu0 %v336
    %387 = vmatprep.subr.mxu0 0.0
    %388 = vmatpush2.msra.mxu0 %v335
    %389 = vmatprep.subr.mxu0 0.0
    %390 = vmatpush2.msra.mxu0 %v334
    %391 = vmatprep.subr.mxu0 0.0
    %392 = vmatpush2.msra.mxu0 %v333
    %393 = vmatprep.subr.mxu0 0.0
    %394 = vmatpush2.msra.mxu0 %v332
    %395 = vmatprep.subr.mxu0 0.0
    %396 = vmatpush2.msra.mxu0 %v331
    %397 = vmatprep.subr.mxu0 0.0
    %398 = vmatpush2.msra.mxu0 %v330
    %399 = vmatprep.subr.mxu0 0.0
    %400 = vmatpush2.msra.mxu0 %v329
    %401 = vmatprep.subr.mxu0 0.0
    %402 = vmatpush2.msra.mxu0 %v328
    %403 = vmatprep.subr.mxu0 0.0
    %404 = vmatpush2.msra.mxu0 %v327
    %405 = vmatprep.subr.mxu0 0.0
    %406 = vmatpush2.msra.mxu0 %v326
    %407 = vmatprep.subr.mxu0 0.0
    %408 = vmatpush2.msra.mxu0 %v325
    %409 = vmatprep.subr.mxu0 0.0
    %410 = vmatpush2.msra.mxu0 %v324
    %411 = vmatprep.mubr.f32.mxu0 %v307
    %412 = vmatmul.mubr.f32.gmra.mxu0 %v306
    %v413 = vpop.f32.mrf.mxu0
    %v414 = vadd.f32 %v345, %v413
    %v415 = vpop.f32.mrf.mxu0
    %416 = vdwg.mxu0
    %417 = vst [vmem:[#allocation11] sm:$0xff] %v414
    // Predicated region
    $region50: #{forward.1} parent=1 // pred_check
      _
    $region51: #{forward.1} parent=1 // pred_check_branch
      %419 = sbr.rel (0) target = $region53
    $region52: #{forward.1} parent=1 // pred_region
      %s421 = ssub.s32 128, 64
      %422 = vsyncadd [#allocation4], %s421
      %s423 = sshll.u32 [#allocation11], 4
      %s424 = int_to_ptr.vmem [resolvable:$true] %s423
      %429 = dma.vmem_to_hbm [thread:$0]  %s424, 64, %s7, [#allocation4], 64, 64, 4
    $region53: #{forward.1} parent=1 // pred_fallthru
      _
    // Predicated region
    $region54: #{forward.1} parent=1 // pred_check
      _
    $region55: #{forward.1} parent=1 // pred_check_branch
      %431 = sbr.rel (0) target = $region57
    $region56: #{forward.1} parent=1 // pred_region
      %432 = dma.done [#allocation4], 128
    $region57: #{forward.1} parent=1 // pred_fallthru
      _
    %433 = vsyncpa [#allocation3], 1
    %434 = vsyncpa [#allocation6], 1
    %435 = vsyncpa [#allocation9], 1
    %436 = vsyncpa [#allocation4], 1

</llo_original>
